<compile_context>
chip_gen: v6e
topology: v6e:2x2x1
jax: 0.10.0
libtpu: 0.0.40
codegen_flags: <defaults>
</compile_context>

<pallas_src>
import jax
import jax.numpy as jnp
from jax.experimental import pallas as pl
from jax.experimental.pallas import tpu as pltpu

IN_SHAPE = (5, 11)        # input_shape
FEAT_SHAPE = (20, 11)     # feature_size
D_IN = IN_SHAPE[0] * IN_SHAPE[1]          # 55
D_H1 = 128
D_H2 = 64
D_OUT = FEAT_SHAPE[0] * FEAT_SHAPE[1]     # 220

LEAKY_SLOPE = 1.0  # nn.LeakyReLU(True) -> negative_slope = True == 1.0


def _round_up(n, m):
    return ((n + m - 1) // m) * m


# --------------------------------------------------------------------------
# Kernel: one affine layer per batch tile.  Weights/bias are VMEM-resident
# across grid iterations (constant index_map); x / out tiles are pipelined.
# The (optional) bf16 cast of x happens in-register inside the kernel.
# --------------------------------------------------------------------------
def _make_affine_kernel(compute_dtype):
    def kernel(x_ref, w_ref, b_ref, o_ref):
        x = x_ref[...].astype(compute_dtype)                      # f32 -> bf16 (or no-op)
        acc = jnp.dot(x, w_ref[...],
                      preferred_element_type=jnp.float32)          # (tile_b, 220) f32
        o_ref[...] = (acc + b_ref[...]).astype(o_ref.dtype)        # f32 epilogue + store
    return kernel


def fold_params(params):
    """Collapse the 3-layer (identity-activation) net into one affine map."""
    w1, b1, w2, b2, w3, b3 = params
    w_eff = w1 @ w2 @ w3                       # (55, 220)
    b_eff = (b1 @ w2 + b2) @ w3 + b3           # (1, 220)
    return w_eff.astype(jnp.float32), b_eff.astype(jnp.float32)


def recommender_forward(x, folded_params, *, use_bf16=True, tile_b=2048):
    """x: (B, 5, 11) or (5, 11) float32 -> (B, 20, 11) float32."""
    if x.ndim == 2:
        x = x[None, ...]
    B = x.shape[0]
    x_flat = x.reshape(B, D_IN).astype(jnp.float32)   # free row-major reshape

    w_eff, b_eff = folded_params                      # (55, 220) f32, (1, 220) f32
    compute_dtype = jnp.bfloat16 if use_bf16 else jnp.float32
    w_k = w_eff.astype(compute_dtype)                 # tiny (~48 KB); MXU input dtype
    # b_eff stays f32: accumulate / add / store in f32.

    # Batch tiling: big tiles to amortize per-step overhead, but cap so medium
    # batches still produce >= 2 tiles (v7x megacore sharding).  Multiple of 16
    # keeps sublanes full (incl. bf16 packing); Pallas masks the ragged tail.
    tile_b = max(16, min(tile_b, _round_up(pl.cdiv(B, 2), 16)))
    n_tiles = pl.cdiv(B, tile_b)

    out = pl.pallas_call(
        _make_affine_kernel(compute_dtype),
        out_shape=jax.ShapeDtypeStruct((B, D_OUT), jnp.float32),
        grid=(n_tiles,),
        in_specs=[
            pl.BlockSpec((tile_b, D_IN), lambda i: (i, 0)),     # x tile (f32)
            pl.BlockSpec((D_IN, D_OUT), lambda i: (0, 0)),      # W (resident)
            pl.BlockSpec((1, D_OUT), lambda i: (0, 0)),         # b (resident)
        ],
        out_specs=pl.BlockSpec((tile_b, D_OUT), lambda i: (i, 0)),
        compiler_params=pltpu.CompilerParams(
            dimension_semantics=("parallel",),   # shard batch tiles over TCs (v7x)
        ),
    )(x_flat, w_k, b_eff)

    return out.reshape(B, FEAT_SHAPE[0], FEAT_SHAPE[1])   # free bitcast reshape


# --------------------------------------------------------------------------
# Parameter init (Kaiming-uniform-ish like nn.Linear) and pure-JAX reference.
# --------------------------------------------------------------------------
def init_params(key):
    ks = jax.random.split(key, 6)

    def linear(kw, kb, fan_in, fan_out):
        bound = 1.0 / jnp.sqrt(jnp.float32(fan_in))
        w = jax.random.uniform(kw, (fan_in, fan_out), jnp.float32, -bound, bound)
        b = jax.random.uniform(kb, (1, fan_out), jnp.float32, -bound, bound)
        return w, b

    w1, b1 = linear(ks[0], ks[1], D_IN, D_H1)
    w2, b2 = linear(ks[2], ks[3], D_H1, D_H2)
    w3, b3 = linear(ks[4], ks[5], D_H2, D_OUT)
    return (w1, b1, w2, b2, w3, b3)


def _reference_forward(x, params):
    """Layer-by-layer f32 reference (faithful to the PyTorch forward)."""
    if x.ndim == 2:
        x = x[None, ...]
    B = x.shape[0]
    w1, b1, w2, b2, w3, b3 = params
    h = x.reshape(B, D_IN) @ w1 + b1
    h = h @ w2 + b2
    h = jnp.where(h >= 0.0, h, LEAKY_SLOPE * h)   # identity (slope 1.0)
    # Dropout(p=0.02): identity at inference.
    h = h @ w3 + b3
    return h.reshape(B, FEAT_SHAPE[0], FEAT_SHAPE[1])


if __name__ == "__main__":
    key = jax.random.PRNGKey(0)
    k_params, k_x1, k_x2 = jax.random.split(key, 3)
    params = init_params(k_params)
    folded = fold_params(params)

    # --- small-batch check, full f32 path (tight tolerance vs reference) ---
    B = 2
    x = jax.random.normal(k_x1, (B, IN_SHAPE[0], IN_SHAPE[1]), jnp.float32)
    y = jax.block_until_ready(recommender_forward(x, folded, use_bf16=False))
    y_ref = _reference_forward(x, params)
    assert y.shape == (B, FEAT_SHAPE[0], FEAT_SHAPE[1])
    assert jnp.allclose(y, y_ref, atol=1e-4, rtol=1e-4)

    # --- multi-tile, ragged-last-tile batch check, bf16 MXU fast path ---
    B2 = 300   # -> tile_b = 160, grid = 2 (second tile masked at rows 300..319)
    x2 = jax.random.normal(k_x2, (B2, IN_SHAPE[0], IN_SHAPE[1]), jnp.float32)
    y2 = jax.block_until_ready(recommender_forward(x2, folded, use_bf16=True))
    y2_ref = _reference_forward(x2, params)
    assert y2.shape == (B2, FEAT_SHAPE[0], FEAT_SHAPE[1])
    assert jnp.allclose(y2, y2_ref, atol=3e-2, rtol=3e-2)
    assert bool(jnp.all(jnp.isfinite(y2)))

    # TODO(synk): validation()/recommend() (argmax over cosine similarity vs the
    # Spotify feature table + web API lookups) are data-dependent host-side
    # logic and are not ported to the kernel.
    print("KERNEL_OK")
</pallas_src>

<mosaic_0001>
module attributes {stable_mosaic.version = 11 : i64} {
  func.func @kernel(%arg0: i32, %arg1: memref<16x55xf32, #tpu.memory_space<vmem>>, %arg2: memref<55x220xf32, #tpu.memory_space<vmem>>, %arg3: memref<1x220xf32, #tpu.memory_space<vmem>>, %arg4: memref<16x220xf32, #tpu.memory_space<vmem>>) attributes {dimension_semantics = [#tpu.dimension_semantics<parallel>], iteration_bounds = array<i64: 1>, scalar_prefetch = 0 : i64, scratch_operands = 0 : i64, tpu.core_type = #tpu.core_type<tc>, window_params = [{transform_indices = @transform_0, window_bounds = array<i64: 16, 55>}, {pipeline_mode = #tpu.pipeline_mode<synchronous>, transform_indices = @transform_1, window_bounds = array<i64: 55, 220>}, {pipeline_mode = #tpu.pipeline_mode<synchronous>, transform_indices = @transform_2, window_bounds = array<i64: 1, 220>}, {transform_indices = @transform_3, window_bounds = array<i64: 16, 220>}]} {
    %c0 = arith.constant 0 : index
    %c0_0 = arith.constant 0 : index
    %0 = vector.load %arg1[%c0, %c0_0] : memref<16x55xf32, #tpu.memory_space<vmem>>, vector<16x55xf32>
    %c0_1 = arith.constant 0 : index
    %c0_2 = arith.constant 0 : index
    %1 = vector.load %arg2[%c0_1, %c0_2] : memref<55x220xf32, #tpu.memory_space<vmem>>, vector<55x220xf32>
    %cst = arith.constant dense<0.000000e+00> : vector<16x220xf32>
    %2 = tpu.matmul %0, %1, %cst {dimension_numbers = #tpu.dot_dimension_numbers<[1], [0], [0], [1], [0, 0, 1, 1], [], []>} : vector<16x55xf32>, vector<55x220xf32>, vector<16x220xf32> -> vector<16x220xf32>
    %c0_3 = arith.constant 0 : index
    %c0_4 = arith.constant 0 : index
    %3 = vector.load %arg3[%c0_3, %c0_4] : memref<1x220xf32, #tpu.memory_space<vmem>>, vector<1x220xf32>
    %4 = vector.broadcast %3 : vector<1x220xf32> to vector<16x220xf32>
    %5 = arith.addf %2, %4 : vector<16x220xf32>
    %c0_5 = arith.constant 0 : index
    %c0_6 = arith.constant 0 : index
    %6 = vector.load %arg4[%c0_5, %c0_6] : memref<16x220xf32, #tpu.memory_space<vmem>>, vector<16x220xf32>
    tpu.vector_store %arg4[%c0_5, %c0_6], %5 {strides = array<i32>} : memref<16x220xf32, #tpu.memory_space<vmem>>, vector<16x220xf32>,
    return
  }
  func.func @transform_0(%arg0: i32) -> (i32, i32) {
    %c0_i32 = arith.constant 0 : i32
    %c0_i32_0 = arith.constant 0 : i32
    return %arg0, %c0_i32 : i32, i32
  }
  func.func @transform_1(%arg0: i32) -> (i32, i32) {
    %c0_i32 = arith.constant 0 : i32
    %c0_i32_0 = arith.constant 0 : i32
    %c0_i32_1 = arith.constant 0 : i32
    return %c0_i32, %c0_i32_0 : i32, i32
  }
  func.func @transform_2(%arg0: i32) -> (i32, i32) {
    %c0_i32 = arith.constant 0 : i32
    %c0_i32_0 = arith.constant 0 : i32
    %c0_i32_1 = arith.constant 0 : i32
    return %c0_i32, %c0_i32_0 : i32, i32
  }
  func.func @transform_3(%arg0: i32) -> (i32, i32) {
    %c0_i32 = arith.constant 0 : i32
    %c0_i32_0 = arith.constant 0 : i32
    return %arg0, %c0_i32 : i32, i32
  }
}

</mosaic_0001>

<llo_original>
// kernel: tpu_custom_call.1
$region0: #{tpu_custom_call.1}
  #allocation0 [shape = 'u32[]', space=smem, size = 0x4, offset = 0x4, fixed_abs, tag = 'smem constant byte address 0x4 - core index']
  #allocation1 [shape = 'u32[144,128]{1,0:T(1,128)}', space=vmem, size = 0x12000, scoped, tag = 'internal scratch']
  %s0 = inlined_call_operand.hbm [shape: f32[2,55], index: 0, kind: input, shape index: {}]
  %s1 = inlined_call_operand.hbm [shape: f32[55,220], index: 1, kind: input, shape index: {}]
  %s2 = inlined_call_operand.vmem [shape: f32[1,220], index: 2, kind: input, shape index: {}]
  %s3 = inlined_call_operand.hbm [shape: f32[2,220], index: 3, kind: output, shape index: {}]
  %s4 = sld [smem:[#allocation0]]
  $region30: #{tpu_custom_call.1} parent=0
    _
  %s6 = ssub.s32 1, %s4
  %s7 = scalar_select 0, %s6, %s4
  $region1: #{tpu_custom_call.1} parent=0
    #allocation2 [shape = 'u8[8192]{0}', space=vmem, size = 0x2000, scoped, tag = 'input window, operand 0, single buffered']
    #allocation3 [shape = 's32[1]{0}', space=sflag, size = 0x4, scoped, tag = 'scoped memory for tpu_custom_call.1']
    #allocation4 [shape = 's32[1]{0}', space=sflag, size = 0x4, scoped, tag = 'scoped memory for tpu_custom_call.1']
    #allocation5 [shape = 'u8[57344]{0}', space=vmem, size = 0xe000, scoped, tag = 'input window, operand 1, single buffered']
    #allocation6 [shape = 's32[1]{0}', space=sflag, size = 0x4, scoped, tag = 'scoped memory for tpu_custom_call.1']
    #allocation7 [shape = 'u8[16384]{0}', space=vmem, size = 0x4000, scoped, tag = 'output window, operand 0, single buffered']
    %8 = vsyncpa [#allocation3], 0
    %9 = vsyncpa [#allocation6], 0
    %10 = vsyncpa [#allocation4], 0
    // Predicated region
    $region2: #{tpu_custom_call.1} parent=1 // pred_check
      _
    $region3: #{tpu_custom_call.1} parent=1 // pred_check_branch
      %12 = sbr.rel (0) target = $region5
    $region4: #{tpu_custom_call.1} parent=1 // pred_region
      %s14 = ssub.s32 256, 32
      %15 = vsyncadd [#allocation3], %s14
      %s16 = sshll.u32 [#allocation2], 4
      %s17 = int_to_ptr.vmem [resolvable:$true] %s16
      %22 = dma.hbm_to_vmem [thread:$0]  %s0, 32, %s17, [#allocation3], 32, 32, 2
    $region5: #{tpu_custom_call.1} parent=1 // pred_fallthru
      _
    // Predicated region
    $region6: #{tpu_custom_call.1} parent=1 // pred_check
      _
    $region7: #{tpu_custom_call.1} parent=1 // pred_check_branch
      %24 = sbr.rel (0) target = $region9
    $region8: #{tpu_custom_call.1} parent=1 // pred_region
      %s26 = ssub.s32 1792, 1792
      %27 = vsyncadd [#allocation6], %s26
      %s28 = sshll.u32 [#allocation5], 4
      %s29 = int_to_ptr.vmem [resolvable:$true] %s28
      %34 = dma.hbm_to_vmem [thread:$0]  %s1, 1792, %s29, [#allocation6], 256, 256, 16
    $region9: #{tpu_custom_call.1} parent=1 // pred_fallthru
      _
    // Predicated region
    $region10: #{tpu_custom_call.1} parent=1 // pred_check
      _
    $region11: #{tpu_custom_call.1} parent=1 // pred_check_branch
      %36 = sbr.rel (0) target = $region13
    $region12: #{tpu_custom_call.1} parent=1 // pred_region
      _
    $region13: #{tpu_custom_call.1} parent=1 // pred_fallthru
      _
    // Predicated region
    $region14: #{tpu_custom_call.1} parent=1 // pred_check
      _
    $region15: #{tpu_custom_call.1} parent=1 // pred_check_branch
      %38 = sbr.rel (0) target = $region17
    $region16: #{tpu_custom_call.1} parent=1 // pred_region
      %39 = dma.done [#allocation3], 256
    $region17: #{tpu_custom_call.1} parent=1 // pred_fallthru
      _
    // Predicated region
    $region18: #{tpu_custom_call.1} parent=1 // pred_check
      _
    $region19: #{tpu_custom_call.1} parent=1 // pred_check_branch
      %41 = sbr.rel (0) target = $region21
    $region20: #{tpu_custom_call.1} parent=1 // pred_region
      %42 = dma.done [#allocation6], 1792
    $region21: #{tpu_custom_call.1} parent=1 // pred_fallthru
      _
    %v43 = vld [vmem:[#allocation2] sm:$0xff]
    %v44 = vld [vmem:[#allocation2 + $0x8] sm:$0xff]
    %v45 = vld [vmem:[#allocation5] sm:$0xff]
    %v46 = vld [vmem:[#allocation5 + $0x8] sm:$0xff]
    %v47 = vld [vmem:[#allocation5 + $0x10] sm:$0xff]
    %v48 = vld [vmem:[#allocation5 + $0x18] sm:$0xff]
    %v49 = vld [vmem:[#allocation5 + $0x20] sm:$0xff]
    %v50 = vld [vmem:[#allocation5 + $0x28] sm:$0xff]
    %v51 = vld [vmem:[#allocation5 + $0x30] sm:$0xff]
    %v52 = vld [vmem:[#allocation5 + $0x38] sm:$0xff]
    %v53 = vld [vmem:[#allocation5 + $0x40] sm:$0xff]
    %v54 = vld [vmem:[#allocation5 + $0x48] sm:$0xff]
    %v55 = vld [vmem:[#allocation5 + $0x50] sm:$0xff]
    %v56 = vld [vmem:[#allocation5 + $0x58] sm:$0xff]
    %v57 = vld [vmem:[#allocation5 + $0x60] sm:$0x7f]
    %v58 = vld [vmem:[#allocation5 + $0x68] sm:$0x7f]
    %v59 = vld [vmem:[%s2] sm:$0x3]
    %v61 = vlaneseq
    %v62 = vshrl.u32 %v61, 7
    %v63 = vsub.s32 0, %v62
    %v64 = vrot.slane %v59, %v63
    %v65 = vlaneseq
    %v66 = vshrl.u32 %v65, 7
    %v67 = vsub.s32 1, %v66
    %v68 = vrot.slane %v59, %v67
    %vm71 = vcmask 449536
    %v73 = vsel %vm71, %v43, 0
    %v76 = vsel %vm71, %v44, 0
    %vm78 = vcmask 1046528
    %v80 = vsel %vm78, %v57, 0
    %v83 = vsel %vm78, %v58, 0
    %85 = vmatprep.subr.mxu0 0.0
    %86 = vmatpush1.msra.mxu0 0.0
    %87 = vmatprep.subr.mxu0 0.0
    %88 = vmatpush1.msra.mxu0 0.0
    %89 = vmatprep.subr.mxu0 0.0
    %90 = vmatpush1.msra.mxu0 0.0
    %91 = vmatprep.subr.mxu0 0.0
    %92 = vmatpush1.msra.mxu0 0.0
    %93 = vmatprep.subr.mxu0 0.0
    %94 = vmatpush1.msra.mxu0 0.0
    %95 = vmatprep.subr.mxu0 0.0
    %96 = vmatpush1.msra.mxu0 0.0
    %97 = vmatprep.subr.mxu0 0.0
    %98 = vmatpush1.msra.mxu0 0.0
    %99 = vmatprep.subr.mxu0 0.0
    %100 = vmatpush1.msra.mxu0 0.0
    %101 = vmatprep.subr.mxu0 0.0
    %102 = vmatpush1.msra.mxu0 0.0
    %103 = vmatprep.subr.mxu0 %v83
    %104 = vmatpush1.msra.mxu0 %v80
    %105 = vmatprep.subr.mxu0 %v56
    %106 = vmatpush1.msra.mxu0 %v55
    %107 = vmatprep.subr.mxu0 %v54
    %108 = vmatpush1.msra.mxu0 %v53
    %109 = vmatprep.subr.mxu0 %v52
    %110 = vmatpush1.msra.mxu0 %v51
    %111 = vmatprep.subr.mxu0 %v50
    %112 = vmatpush1.msra.mxu0 %v49
    %113 = vmatprep.subr.mxu0 %v48
    %114 = vmatpush1.msra.mxu0 %v47
    %115 = vmatprep.subr.mxu0 %v46
    %116 = vmatpush1.msra.mxu0 %v45
    %117 = vmatprep.subr.mxu0 0.0
    %118 = vmatpush2.msra.mxu0 0.0
    %119 = vmatprep.subr.mxu0 0.0
    %120 = vmatpush2.msra.mxu0 0.0
    %121 = vmatprep.subr.mxu0 0.0
    %122 = vmatpush2.msra.mxu0 0.0
    %123 = vmatprep.subr.mxu0 0.0
    %124 = vmatpush2.msra.mxu0 0.0
    %125 = vmatprep.subr.mxu0 0.0
    %126 = vmatpush2.msra.mxu0 0.0
    %127 = vmatprep.subr.mxu0 0.0
    %128 = vmatpush2.msra.mxu0 0.0
    %129 = vmatprep.subr.mxu0 0.0
    %130 = vmatpush2.msra.mxu0 0.0
    %131 = vmatprep.subr.mxu0 0.0
    %132 = vmatpush2.msra.mxu0 0.0
    %133 = vmatprep.subr.mxu0 0.0
    %134 = vmatpush2.msra.mxu0 0.0
    %135 = vmatprep.subr.mxu0 0.0
    %136 = vmatpush2.msra.mxu0 0.0
    %137 = vmatprep.subr.mxu0 0.0
    %138 = vmatpush2.msra.mxu0 0.0
    %139 = vmatprep.subr.mxu0 0.0
    %140 = vmatpush2.msra.mxu0 0.0
    %141 = vmatprep.subr.mxu0 0.0
    %142 = vmatpush2.msra.mxu0 0.0
    %143 = vmatprep.subr.mxu0 0.0
    %144 = vmatpush2.msra.mxu0 0.0
    %145 = vmatprep.subr.mxu0 0.0
    %146 = vmatpush2.msra.mxu0 0.0
    %147 = vmatprep.subr.mxu0 0.0
    %148 = vmatpush2.msra.mxu0 0.0
    %149 = vmatprep.mubr.f32.mxu0 0.0
    %150 = vmatmul.mubr.f32.gmra.mxu0 %v73
    %v151 = vpop.f32.mrf.mxu0
    %v152 = vadd.f32 %v64, %v151
    %v153 = vpop.f32.mrf.mxu0
    %v154 = vadd.f32 %v68, %v153
    %155 = vmatprep.mubr.f32.mxu0 0.0
    %156 = vmatmul.mubr.f32.gmra.mxu0 %v76
    %v157 = vpop.f32.mrf.mxu0
    %v158 = vadd.f32 %v64, %v157
    %v159 = vpop.f32.mrf.mxu0
    %v160 = vadd.f32 %v68, %v159
    %161 = vdwg.mxu0
    %v166 = vcombine.low %v152, %v154
    %v167 = vcombine.high %v152, %v154
    %v169 = vunpack.c.l.s4 1983009808
    %v170 = vunpack.c.0.s8 %v169
    %v171 = vlaneseq
    %v172 = vshrl.u32 %v171, 7
    %v173 = vsub.s32 %v170, %v172
    %v174 = vrot.slane %v166, %v173
    %v176 = vunpack.c.l.s4 1983009808
    %v177 = vunpack.c.0.s8 %v176
    %v178 = vlaneseq
    %v179 = vshrl.u32 %v178, 7
    %v180 = vsub.s32 %v177, %v179
    %v181 = vrot.slane %v167, %v180
    %v182 = vcombine.high %v174, %v174
    %v183 = vcombine.high %v181, %v181
    %v184 = vcombine.low %v158, %v160
    %v185 = vcombine.high %v158, %v160
    %v187 = vunpack.c.l.s4 1983009808
    %v188 = vunpack.c.0.s8 %v187
    %v189 = vlaneseq
    %v190 = vshrl.u32 %v189, 7
    %v191 = vsub.s32 %v188, %v190
    %v192 = vrot.slane %v184, %v191
    %v194 = vunpack.c.l.s4 1983009808
    %v195 = vunpack.c.0.s8 %v194
    %v196 = vlaneseq
    %v197 = vshrl.u32 %v196, 7
    %v198 = vsub.s32 %v195, %v197
    %v199 = vrot.slane %v185, %v198
    %v200 = vcombine.high %v192, %v192
    %v201 = vcombine.high %v199, %v199
    %vm210 = vcmask 1041408
    %vm211 = vcmask 748546
    %vm212 = vmor %vm211, %vm210
    %213 = vst.msk [vmem:[#allocation7] sm:$0xf] %vm212, %v174
    %214 = vst.msk [vmem:[#allocation7 + $0x4] sm:$0xf] %vm212, %v182
    %215 = vst.msk [vmem:[#allocation7 + $0x8] sm:$0xf] %vm212, %v181
    %216 = vst.msk [vmem:[#allocation7 + $0xc] sm:$0xf] %vm212, %v183
    %217 = vst.msk [vmem:[#allocation7 + $0x10] sm:$0xf] %vm212, %v192
    %218 = vst.msk [vmem:[#allocation7 + $0x14] sm:$0xf] %vm212, %v200
    %219 = vst.msk [vmem:[#allocation7 + $0x18] sm:$0xf] %vm212, %v199
    %220 = vst.msk [vmem:[#allocation7 + $0x1c] sm:$0xf] %vm212, %v201
    // Predicated region
    $region22: #{tpu_custom_call.1} parent=1 // pred_check
      _
    $region23: #{tpu_custom_call.1} parent=1 // pred_check_branch
      %222 = sbr.rel (0) target = $region25
    $region24: #{tpu_custom_call.1} parent=1 // pred_region
      %s224 = ssub.s32 512, 64
      %225 = vsyncadd [#allocation4], %s224
      %s226 = sshll.u32 [#allocation7], 4
      %s227 = int_to_ptr.vmem [resolvable:$true] %s226
      %232 = dma.vmem_to_hbm [thread:$0]  %s227, 64, %s3, [#allocation4], 64, 64, 4
    $region25: #{tpu_custom_call.1} parent=1 // pred_fallthru
      _
    // Predicated region
    $region26: #{tpu_custom_call.1} parent=1 // pred_check
      _
    $region27: #{tpu_custom_call.1} parent=1 // pred_check_branch
      %234 = sbr.rel (0) target = $region29
    $region28: #{tpu_custom_call.1} parent=1 // pred_region
      %235 = dma.done [#allocation4], 512
    $region29: #{tpu_custom_call.1} parent=1 // pred_fallthru
      _
    %236 = vsyncpa [#allocation3], 1
    %237 = vsyncpa [#allocation6], 1
    %238 = vsyncpa [#allocation4], 1

</llo_original>
